<compile_context>
chip_gen: v7x
topology: tpu7x:2x2x1
jax: 0.10.0
libtpu: 0.0.40
codegen_flags: <defaults>
</compile_context>

<pallas_src>
import math

import jax
import jax.numpy as jnp
from jax.experimental import pallas as pl
from jax.experimental.pallas import tpu as pltpu

INPUT_DIM = 3          # columns: x, y, t  (named-accessor order of the module)
HIDDEN = 40            # true hidden width (multiple of 8 -> sublane friendly)
OUTPUT_DIM = 1
FEAT_PAD = 8           # input feature rows padded 3 -> 8 (sublane aligned)
OUT_PAD = 8            # last-layer rows padded 1 -> 8 (sublane aligned)

_SQRT2 = math.sqrt(2.0)
_PI = math.pi


def hard_mlp_time_kernel(x_ref, w1_ref, b1_ref, w2_ref, b2_ref, w3_ref, b3_ref,
                         o_ref):
    x = x_ref[...]                        # (8, T): rows 0..2 are x, y, t
    xc = x[0:1, :]                        # (1, T)
    yc = x[1:2, :]
    tc = x[2:3, :]

    # ---- layer 1: Linear(3, 40) as VPU broadcast-FMAs (skip MXU for K=3)
    w1 = w1_ref[...]                      # (40, 8); lanes 0..2 hold real cols
    h1 = (w1[:, 0:1] * xc + w1[:, 1:2] * yc + w1[:, 2:3] * tc) + b1_ref[...]
    h1 = jnp.maximum(h1, 0.0)             # (40, T)

    # ---- layer 2: Linear(40, 40) on the MXU (true width, no 128 padding)
    h2 = jnp.dot(w2_ref[...], h1, preferred_element_type=jnp.float32) + b2_ref[...]
    h2 = jnp.maximum(h2, 0.0)             # (40, T)

    # ---- layer 3: Linear(40, 1); output rows padded 1 -> 8, row 0 is real
    y = jnp.dot(w3_ref[...], h2, preferred_element_type=jnp.float32) + b3_ref[...]
    y_mlp = y[0:1, :]                     # (1, T)

    # ---- hard constraints, computed at (1, T): lane-dense, no wasted lanes
    hard_space = xc * (1.0 - xc) * yc * (1.0 - yc)
    hard_t = (jnp.sin(_PI * xc) * jnp.sin(_PI * yc)
              * jnp.cos(_SQRT2 * _PI * tc))

    o_ref[...] = hard_space * y_mlp * tc + hard_t


def _round_up(a, m):
    return (a + m - 1) // m * m


def hard_mlp_time(x, params, *, tile_n=2048):
    """x: (N, 3) float32 with columns (x, y, t).  Returns (N, 1) float32."""
    n = x.shape[0]
    w1, b1, w2, b2, w3, b3 = params       # weights stored (fan_in, fan_out)

    # batch-on-lanes layout; tile the batch, pad N up to a tile multiple
    tile = min(tile_n, _round_up(n, 128))
    n_pad = _round_up(n, tile)
    grid = (n_pad // tile,)

    f32 = jnp.float32
    x_t = jnp.zeros((FEAT_PAD, n_pad), f32).at[:INPUT_DIM, :n].set(x.T)
    w1_t = jnp.zeros((HIDDEN, FEAT_PAD), f32).at[:, :INPUT_DIM].set(w1.T)
    b1_c = b1.astype(f32).reshape(HIDDEN, 1)
    w2_t = w2.T.astype(f32)                                     # (40, 40)
    b2_c = b2.astype(f32).reshape(HIDDEN, 1)
    w3_t = jnp.zeros((OUT_PAD, HIDDEN), f32).at[:OUTPUT_DIM, :].set(w3.T)
    b3_c = jnp.zeros((OUT_PAD, 1), f32).at[:OUTPUT_DIM, 0].set(b3)

    const = lambda i: (0, 0)               # weights: VMEM-resident across steps
    out_p = pl.pallas_call(
        hard_mlp_time_kernel,
        out_shape=jax.ShapeDtypeStruct((OUTPUT_DIM, n_pad), f32),
        grid=grid,
        in_specs=[
            pl.BlockSpec((FEAT_PAD, tile), lambda i: (0, i)),   # x tile
            pl.BlockSpec((HIDDEN, FEAT_PAD), const),            # W1^T
            pl.BlockSpec((HIDDEN, 1), const),                   # b1
            pl.BlockSpec((HIDDEN, HIDDEN), const),              # W2^T
            pl.BlockSpec((HIDDEN, 1), const),                   # b2
            pl.BlockSpec((OUT_PAD, HIDDEN), const),             # W3^T (padded)
            pl.BlockSpec((OUT_PAD, 1), const),                  # b3  (padded)
        ],
        out_specs=pl.BlockSpec((OUTPUT_DIM, tile), lambda i: (0, i)),
        compiler_params=pltpu.CompilerParams(
            dimension_semantics=("parallel",)),
    )(x_t, w1_t, b1_c, w2_t, b2_c, w3_t, b3_c)

    return out_p[:, :n].T                  # (N, 1)


def init_params(key):
    """PyTorch-Linear-style init: U(-1/sqrt(fan_in), 1/sqrt(fan_in))."""
    ks = jax.random.split(key, 6)

    def lin(kw, kb, fan_in, fan_out):
        bound = 1.0 / math.sqrt(fan_in)
        w = jax.random.uniform(kw, (fan_in, fan_out), jnp.float32, -bound, bound)
        b = jax.random.uniform(kb, (fan_out,), jnp.float32, -bound, bound)
        return w, b

    w1, b1 = lin(ks[0], ks[1], INPUT_DIM, HIDDEN)
    w2, b2 = lin(ks[2], ks[3], HIDDEN, HIDDEN)
    w3, b3 = lin(ks[4], ks[5], HIDDEN, OUTPUT_DIM)
    return (w1, b1, w2, b2, w3, b3)


def reference(x, params):
    w1, b1, w2, b2, w3, b3 = params
    h = jnp.maximum(x @ w1 + b1, 0.0)
    h = jnp.maximum(h @ w2 + b2, 0.0)
    y = h @ w3 + b3
    xc, yc, tc = x[:, 0:1], x[:, 1:2], x[:, 2:3]
    hard_space = xc * (1 - xc) * yc * (1 - yc)
    hard_t = jnp.sin(_PI * xc) * jnp.sin(_PI * yc) * jnp.cos(_SQRT2 * _PI * tc)
    return hard_space * y * tc + hard_t


if __name__ == "__main__":
    key = jax.random.PRNGKey(0)
    k_param, k_x, k_x2 = jax.random.split(key, 3)

    params = init_params(k_param)

    # small batch of 8 points, columns are (x, y, t) in [0, 1)
    x = jax.random.uniform(k_x, (8, INPUT_DIM), jnp.float32)
    out = jax.block_until_ready(hard_mlp_time(x, params))
    ref = reference(x, params)
    assert out.shape == (8, OUTPUT_DIM)
    assert jnp.allclose(out, ref, atol=1e-5, rtol=1e-5)

    # also exercise the tiled/padded path (N not a multiple of 128)
    x2 = jax.random.uniform(k_x2, (300, INPUT_DIM), jnp.float32)
    out2 = jax.block_until_ready(hard_mlp_time(x2, params))
    ref2 = reference(x2, params)
    assert out2.shape == (300, OUTPUT_DIM)
    assert jnp.allclose(out2, ref2, atol=1e-5, rtol=1e-5)

    print("KERNEL_OK")
</pallas_src>

<mosaic_0001>
module attributes {stable_mosaic.version = 11 : i64} {
  func.func @hard_mlp_time_kernel(%arg0: i32, %arg1: memref<8x128xf32, #tpu.memory_space<vmem>>, %arg2: memref<40x8xf32, #tpu.memory_space<vmem>>, %arg3: memref<40x1xf32, #tpu.memory_space<vmem>>, %arg4: memref<40x40xf32, #tpu.memory_space<vmem>>, %arg5: memref<40x1xf32, #tpu.memory_space<vmem>>, %arg6: memref<8x40xf32, #tpu.memory_space<vmem>>, %arg7: memref<8x1xf32, #tpu.memory_space<vmem>>, %arg8: memref<1x128xf32, #tpu.memory_space<vmem>>) attributes {dimension_semantics = [#tpu.dimension_semantics<parallel>], iteration_bounds = array<i64: 1>, scalar_prefetch = 0 : i64, scratch_operands = 0 : i64, tpu.core_type = #tpu.core_type<tc>, window_params = [{transform_indices = @transform_0, window_bounds = array<i64: 8, 128>}, {pipeline_mode = #tpu.pipeline_mode<synchronous>, transform_indices = @transform_1, window_bounds = array<i64: 40, 8>}, {pipeline_mode = #tpu.pipeline_mode<synchronous>, transform_indices = @transform_2, window_bounds = array<i64: 40, 1>}, {pipeline_mode = #tpu.pipeline_mode<synchronous>, transform_indices = @transform_3, window_bounds = array<i64: 40, 40>}, {pipeline_mode = #tpu.pipeline_mode<synchronous>, transform_indices = @transform_4, window_bounds = array<i64: 40, 1>}, {pipeline_mode = #tpu.pipeline_mode<synchronous>, transform_indices = @transform_5, window_bounds = array<i64: 8, 40>}, {pipeline_mode = #tpu.pipeline_mode<synchronous>, transform_indices = @transform_6, window_bounds = array<i64: 8, 1>}, {transform_indices = @transform_7, window_bounds = array<i64: 1, 128>}]} {
    %c0 = arith.constant 0 : index
    %c0_0 = arith.constant 0 : index
    %0 = vector.load %arg1[%c0, %c0_0] : memref<8x128xf32, #tpu.memory_space<vmem>>, vector<8x128xf32>
    %1 = vector.extract_strided_slice %0 {offsets = [0, 0], sizes = [1, 128], strides = [1, 1]} : vector<8x128xf32> to vector<1x128xf32>
    %2 = vector.extract_strided_slice %0 {offsets = [1, 0], sizes = [1, 128], strides = [1, 1]} : vector<8x128xf32> to vector<1x128xf32>
    %3 = vector.extract_strided_slice %0 {offsets = [2, 0], sizes = [1, 128], strides = [1, 1]} : vector<8x128xf32> to vector<1x128xf32>
    %c0_1 = arith.constant 0 : index
    %c0_2 = arith.constant 0 : index
    %4 = vector.load %arg2[%c0_1, %c0_2] : memref<40x8xf32, #tpu.memory_space<vmem>>, vector<40x8xf32>
    %5 = vector.extract_strided_slice %4 {offsets = [0, 0], sizes = [40, 1], strides = [1, 1]} : vector<40x8xf32> to vector<40x1xf32>
    %6 = vector.broadcast %5 : vector<40x1xf32> to vector<40x128xf32>
    %7 = vector.broadcast %1 : vector<1x128xf32> to vector<40x128xf32>
    %8 = arith.mulf %6, %7 : vector<40x128xf32>
    %9 = vector.extract_strided_slice %4 {offsets = [0, 1], sizes = [40, 1], strides = [1, 1]} : vector<40x8xf32> to vector<40x1xf32>
    %10 = vector.broadcast %9 : vector<40x1xf32> to vector<40x128xf32>
    %11 = vector.broadcast %2 : vector<1x128xf32> to vector<40x128xf32>
    %12 = arith.mulf %10, %11 : vector<40x128xf32>
    %13 = arith.addf %8, %12 : vector<40x128xf32>
    %14 = vector.extract_strided_slice %4 {offsets = [0, 2], sizes = [40, 1], strides = [1, 1]} : vector<40x8xf32> to vector<40x1xf32>
    %15 = vector.broadcast %14 : vector<40x1xf32> to vector<40x128xf32>
    %16 = vector.broadcast %3 : vector<1x128xf32> to vector<40x128xf32>
    %17 = arith.mulf %15, %16 : vector<40x128xf32>
    %18 = arith.addf %13, %17 : vector<40x128xf32>
    %c0_3 = arith.constant 0 : index
    %c0_4 = arith.constant 0 : index
    %19 = vector.load %arg3[%c0_3, %c0_4] : memref<40x1xf32, #tpu.memory_space<vmem>>, vector<40x1xf32>
    %20 = vector.broadcast %19 : vector<40x1xf32> to vector<40x128xf32>
    %21 = arith.addf %18, %20 : vector<40x128xf32>
    %cst = arith.constant 0.000000e+00 : f32
    %22 = vector.broadcast %cst : f32 to vector<40x128xf32>
    %23 = arith.maximumf %21, %22 : vector<40x128xf32>
    %c0_5 = arith.constant 0 : index
    %c0_6 = arith.constant 0 : index
    %24 = vector.load %arg4[%c0_5, %c0_6] : memref<40x40xf32, #tpu.memory_space<vmem>>, vector<40x40xf32>
    %cst_7 = arith.constant dense<0.000000e+00> : vector<40x128xf32>
    %25 = tpu.matmul %24, %23, %cst_7 {dimension_numbers = #tpu.dot_dimension_numbers<[1], [0], [0], [1], [0, 0, 1, 1], [], []>} : vector<40x40xf32>, vector<40x128xf32>, vector<40x128xf32> -> vector<40x128xf32>
    %c0_8 = arith.constant 0 : index
    %c0_9 = arith.constant 0 : index
    %26 = vector.load %arg5[%c0_8, %c0_9] : memref<40x1xf32, #tpu.memory_space<vmem>>, vector<40x1xf32>
    %27 = vector.broadcast %26 : vector<40x1xf32> to vector<40x128xf32>
    %28 = arith.addf %25, %27 : vector<40x128xf32>
    %cst_10 = arith.constant 0.000000e+00 : f32
    %29 = vector.broadcast %cst_10 : f32 to vector<40x128xf32>
    %30 = arith.maximumf %28, %29 : vector<40x128xf32>
    %c0_11 = arith.constant 0 : index
    %c0_12 = arith.constant 0 : index
    %31 = vector.load %arg6[%c0_11, %c0_12] : memref<8x40xf32, #tpu.memory_space<vmem>>, vector<8x40xf32>
    %cst_13 = arith.constant dense<0.000000e+00> : vector<8x128xf32>
    %32 = tpu.matmul %31, %30, %cst_13 {dimension_numbers = #tpu.dot_dimension_numbers<[1], [0], [0], [1], [0, 0, 1, 1], [], []>} : vector<8x40xf32>, vector<40x128xf32>, vector<8x128xf32> -> vector<8x128xf32>
    %c0_14 = arith.constant 0 : index
    %c0_15 = arith.constant 0 : index
    %33 = vector.load %arg7[%c0_14, %c0_15] : memref<8x1xf32, #tpu.memory_space<vmem>>, vector<8x1xf32>
    %34 = vector.broadcast %33 : vector<8x1xf32> to vector<8x128xf32>
    %35 = arith.addf %32, %34 : vector<8x128xf32>
    %36 = vector.extract_strided_slice %35 {offsets = [0, 0], sizes = [1, 128], strides = [1, 1]} : vector<8x128xf32> to vector<1x128xf32>
    %cst_16 = arith.constant 1.000000e+00 : f32
    %37 = vector.broadcast %cst_16 : f32 to vector<1x128xf32>
    %38 = arith.subf %37, %1 : vector<1x128xf32>
    %39 = arith.mulf %1, %38 : vector<1x128xf32>
    %40 = arith.mulf %39, %2 : vector<1x128xf32>
    %cst_17 = arith.constant 1.000000e+00 : f32
    %41 = vector.broadcast %cst_17 : f32 to vector<1x128xf32>
    %42 = arith.subf %41, %2 : vector<1x128xf32>
    %43 = arith.mulf %40, %42 : vector<1x128xf32>
    %cst_18 = arith.constant 3.14159274 : f32
    %44 = vector.broadcast %cst_18 : f32 to vector<1x128xf32>
    %45 = arith.mulf %44, %1 : vector<1x128xf32>
    %46 = math.sin %45 : vector<1x128xf32>
    %cst_19 = arith.constant 3.14159274 : f32
    %47 = vector.broadcast %cst_19 : f32 to vector<1x128xf32>
    %48 = arith.mulf %47, %2 : vector<1x128xf32>
    %49 = math.sin %48 : vector<1x128xf32>
    %50 = arith.mulf %46, %49 : vector<1x128xf32>
    %cst_20 = arith.constant 4.44288301 : f32
    %51 = vector.broadcast %cst_20 : f32 to vector<1x128xf32>
    %52 = arith.mulf %51, %3 : vector<1x128xf32>
    %53 = math.cos %52 : vector<1x128xf32>
    %54 = arith.mulf %50, %53 : vector<1x128xf32>
    %55 = arith.mulf %43, %36 : vector<1x128xf32>
    %56 = arith.mulf %55, %3 : vector<1x128xf32>
    %57 = arith.addf %56, %54 : vector<1x128xf32>
    %c0_21 = arith.constant 0 : index
    %c0_22 = arith.constant 0 : index
    %58 = vector.load %arg8[%c0_21, %c0_22] : memref<1x128xf32, #tpu.memory_space<vmem>>, vector<1x128xf32>
    tpu.vector_store %arg8[%c0_21, %c0_22], %57 {strides = array<i32>} : memref<1x128xf32, #tpu.memory_space<vmem>>, vector<1x128xf32>,
    return
  }
  func.func @transform_0(%arg0: i32) -> (i32, i32) {
    %c0_i32 = arith.constant 0 : i32
    %c0_i32_0 = arith.constant 0 : i32
    return %c0_i32, %arg0 : i32, i32
  }
  func.func @transform_1(%arg0: i32) -> (i32, i32) {
    %c0_i32 = arith.constant 0 : i32
    %c0_i32_0 = arith.constant 0 : i32
    %c0_i32_1 = arith.constant 0 : i32
    return %c0_i32, %c0_i32_0 : i32, i32
  }
  func.func @transform_2(%arg0: i32) -> (i32, i32) {
    %c0_i32 = arith.constant 0 : i32
    %c0_i32_0 = arith.constant 0 : i32
    %c0_i32_1 = arith.constant 0 : i32
    return %c0_i32, %c0_i32_0 : i32, i32
  }
  func.func @transform_3(%arg0: i32) -> (i32, i32) {
    %c0_i32 = arith.constant 0 : i32
    %c0_i32_0 = arith.constant 0 : i32
    %c0_i32_1 = arith.constant 0 : i32
    return %c0_i32, %c0_i32_0 : i32, i32
  }
  func.func @transform_4(%arg0: i32) -> (i32, i32) {
    %c0_i32 = arith.constant 0 : i32
    %c0_i32_0 = arith.constant 0 : i32
    %c0_i32_1 = arith.constant 0 : i32
    return %c0_i32, %c0_i32_0 : i32, i32
  }
  func.func @transform_5(%arg0: i32) -> (i32, i32) {
    %c0_i32 = arith.constant 0 : i32
    %c0_i32_0 = arith.constant 0 : i32
    %c0_i32_1 = arith.constant 0 : i32
    return %c0_i32, %c0_i32_0 : i32, i32
  }
  func.func @transform_6(%arg0: i32) -> (i32, i32) {
    %c0_i32 = arith.constant 0 : i32
    %c0_i32_0 = arith.constant 0 : i32
    %c0_i32_1 = arith.constant 0 : i32
    return %c0_i32, %c0_i32_0 : i32, i32
  }
  func.func @transform_7(%arg0: i32) -> (i32, i32) {
    %c0_i32 = arith.constant 0 : i32
    %c0_i32_0 = arith.constant 0 : i32
    return %c0_i32, %arg0 : i32, i32
  }
}

</mosaic_0001>

<llo_original>
// kernel: tpu_custom_call.1
$region0: #{tpu_custom_call.1}
  #allocation0 [shape = 'u32[]', space=smem, size = 0x4, offset = 0x4, fixed_abs, tag = 'smem constant byte address 0x4 - core index']
  #allocation1 [shape = 'u32[144,128]{1,0:T(1,128)}', space=vmem, size = 0x12000, scoped, tag = 'internal scratch']
  %s0 = inlined_call_operand.vmem [shape: f32[8,128], index: 0, kind: input, shape index: {}]
  %s1 = inlined_call_operand.vmem [shape: f32[40,8], index: 1, kind: input, shape index: {}]
  %s2 = inlined_call_operand.vmem [shape: f32[40,1], index: 2, kind: input, shape index: {}]
  %s3 = inlined_call_operand.vmem [shape: f32[40,40], index: 3, kind: input, shape index: {}]
  %s4 = inlined_call_operand.vmem [shape: f32[40,1], index: 4, kind: input, shape index: {}]
  %s5 = inlined_call_operand.vmem [shape: f32[8,40], index: 5, kind: input, shape index: {}]
  %s6 = inlined_call_operand.vmem [shape: f32[8,1], index: 6, kind: input, shape index: {}]
  %s7 = inlined_call_operand.hbm [shape: f32[1,128], index: 7, kind: output, shape index: {}]
  %s8 = sld [smem:[#allocation0]]
  $region38: #{tpu_custom_call.1} parent=0
    _
  %s10 = ssub.s32 1, %s8
  %s11 = scalar_select 0, %s10, %s8
  $region1: #{tpu_custom_call.1} parent=0
    #allocation2 [shape = 'u8[512]{0}', space=vmem, size = 0x400, scoped, tag = 'output window, operand 0, single buffered']
    #allocation3 [shape = 's32[1]{0}', space=sflag, size = 0x4, scoped, tag = 'scoped memory for tpu_custom_call.1']
    %12 = vsyncpa [#allocation3], 0
    // Predicated region
    $region2: #{tpu_custom_call.1} parent=1 // pred_check
      _
    $region3: #{tpu_custom_call.1} parent=1 // pred_check_branch
      %14 = sbr.rel (0) target = $region5
    $region4: #{tpu_custom_call.1} parent=1 // pred_region
      _
    $region5: #{tpu_custom_call.1} parent=1 // pred_fallthru
      _
    // Predicated region
    $region6: #{tpu_custom_call.1} parent=1 // pred_check
      _
    $region7: #{tpu_custom_call.1} parent=1 // pred_check_branch
      %16 = sbr.rel (0) target = $region9
    $region8: #{tpu_custom_call.1} parent=1 // pred_region
      _
    $region9: #{tpu_custom_call.1} parent=1 // pred_fallthru
      _
    // Predicated region
    $region10: #{tpu_custom_call.1} parent=1 // pred_check
      _
    $region11: #{tpu_custom_call.1} parent=1 // pred_check_branch
      %18 = sbr.rel (0) target = $region13
    $region12: #{tpu_custom_call.1} parent=1 // pred_region
      _
    $region13: #{tpu_custom_call.1} parent=1 // pred_fallthru
      _
    // Predicated region
    $region14: #{tpu_custom_call.1} parent=1 // pred_check
      _
    $region15: #{tpu_custom_call.1} parent=1 // pred_check_branch
      %20 = sbr.rel (0) target = $region17
    $region16: #{tpu_custom_call.1} parent=1 // pred_region
      _
    $region17: #{tpu_custom_call.1} parent=1 // pred_fallthru
      _
    // Predicated region
    $region18: #{tpu_custom_call.1} parent=1 // pred_check
      _
    $region19: #{tpu_custom_call.1} parent=1 // pred_check_branch
      %22 = sbr.rel (0) target = $region21
    $region20: #{tpu_custom_call.1} parent=1 // pred_region
      _
    $region21: #{tpu_custom_call.1} parent=1 // pred_fallthru
      _
    // Predicated region
    $region22: #{tpu_custom_call.1} parent=1 // pred_check
      _
    $region23: #{tpu_custom_call.1} parent=1 // pred_check_branch
      %24 = sbr.rel (0) target = $region25
    $region24: #{tpu_custom_call.1} parent=1 // pred_region
      _
    $region25: #{tpu_custom_call.1} parent=1 // pred_fallthru
      _
    // Predicated region
    $region26: #{tpu_custom_call.1} parent=1 // pred_check
      _
    $region27: #{tpu_custom_call.1} parent=1 // pred_check_branch
      %26 = sbr.rel (0) target = $region29
    $region28: #{tpu_custom_call.1} parent=1 // pred_region
      _
    $region29: #{tpu_custom_call.1} parent=1 // pred_fallthru
      _
    %v27 = vld [vmem:[%s0] sm:$0xff]
    %v28 = vld [vmem:[%s1] sm:$0xff]
    %v29 = vld [vmem:[%s1 + $0x8] sm:$0xff]
    %v30 = vld [vmem:[%s1 + $0x10] sm:$0xff]
    %v31 = vld [vmem:[%s1 + $0x18] sm:$0xff]
    %v32 = vld [vmem:[%s1 + $0x20] sm:$0xff]
    %34 = vset.pattern.permute.xlu0 0
    %35 = vperm.xlu0 %34, %v28
    %v36 = vpop.permute.xlu0 %35
    %39 = vset.pattern.permute.xlu0 0
    %40 = vperm.xlu0 %39, %v29
    %v41 = vpop.permute.xlu0 %40
    %44 = vset.pattern.permute.xlu0 0
    %45 = vperm.xlu0 %44, %v30
    %v46 = vpop.permute.xlu0 %45
    %49 = vset.pattern.permute.xlu0 0
    %50 = vperm.xlu0 %49, %v31
    %v51 = vpop.permute.xlu0 %50
    %54 = vset.pattern.permute.xlu0 0
    %55 = vperm.xlu0 %54, %v32
    %v56 = vpop.permute.xlu0 %55
    %v58 = vlaneseq
    %v59 = vshrl.u32 %v58, 7
    %v60 = vsub.s32 0, %v59
    %v61 = vrot.slane %v27, %v60
    %v62 = vmul.f32 %v36, %v61
    %v63 = vmul.f32 %v41, %v61
    %v64 = vmul.f32 %v46, %v61
    %v65 = vmul.f32 %v51, %v61
    %v66 = vmul.f32 %v56, %v61
    %67 = vset.pattern.permute.xlu0 1
    %68 = vperm.xlu0 %67, %v28
    %v69 = vpop.permute.xlu0 %68
    %71 = vset.pattern.permute.xlu0 1
    %72 = vperm.xlu0 %71, %v29
    %v73 = vpop.permute.xlu0 %72
    %75 = vset.pattern.permute.xlu0 1
    %76 = vperm.xlu0 %75, %v30
    %v77 = vpop.permute.xlu0 %76
    %79 = vset.pattern.permute.xlu0 1
    %80 = vperm.xlu0 %79, %v31
    %v81 = vpop.permute.xlu0 %80
    %83 = vset.pattern.permute.xlu0 1
    %84 = vperm.xlu0 %83, %v32
    %v85 = vpop.permute.xlu0 %84
    %v87 = vlaneseq
    %v88 = vshrl.u32 %v87, 7
    %v89 = vsub.s32 1, %v88
    %v90 = vrot.slane %v27, %v89
    %v91 = vmul.f32 %v69, %v90
    %v92 = vmul.f32 %v73, %v90
    %v93 = vmul.f32 %v77, %v90
    %v94 = vmul.f32 %v81, %v90
    %v95 = vmul.f32 %v85, %v90
    %v96 = vadd.f32 %v62, %v91
    %v97 = vadd.f32 %v63, %v92
    %v98 = vadd.f32 %v64, %v93
    %v99 = vadd.f32 %v65, %v94
    %v100 = vadd.f32 %v66, %v95
    %101 = vset.pattern.permute.xlu0 2
    %102 = vperm.xlu0 %101, %v28
    %v103 = vpop.permute.xlu0 %102
    %105 = vset.pattern.permute.xlu0 2
    %106 = vperm.xlu0 %105, %v29
    %v107 = vpop.permute.xlu0 %106
    %109 = vset.pattern.permute.xlu0 2
    %110 = vperm.xlu0 %109, %v30
    %v111 = vpop.permute.xlu0 %110
    %113 = vset.pattern.permute.xlu0 2
    %114 = vperm.xlu0 %113, %v31
    %v115 = vpop.permute.xlu0 %114
    %117 = vset.pattern.permute.xlu0 2
    %118 = vperm.xlu0 %117, %v32
    %v119 = vpop.permute.xlu0 %118
    %v121 = vlaneseq
    %v122 = vshrl.u32 %v121, 7
    %v123 = vsub.s32 2, %v122
    %v124 = vrot.slane %v27, %v123
    %v125 = vmul.f32 %v103, %v124
    %v126 = vmul.f32 %v107, %v124
    %v127 = vmul.f32 %v111, %v124
    %v128 = vmul.f32 %v115, %v124
    %v129 = vmul.f32 %v119, %v124
    %v130 = vadd.f32 %v96, %v125
    %v131 = vadd.f32 %v97, %v126
    %v132 = vadd.f32 %v98, %v127
    %v133 = vadd.f32 %v99, %v128
    %v134 = vadd.f32 %v100, %v129
    %v135 = vld [vmem:[%s2] sm:$0xff]
    %v136 = vld [vmem:[%s2 + $0x8] sm:$0xff]
    %v137 = vld [vmem:[%s2 + $0x10] sm:$0xff]
    %v138 = vld [vmem:[%s2 + $0x18] sm:$0xff]
    %v139 = vld [vmem:[%s2 + $0x20] sm:$0xff]
    %141 = vset.pattern.permute.xlu0 0
    %142 = vperm.xlu0 %141, %v135
    %v143 = vpop.permute.xlu0 %142
    %146 = vset.pattern.permute.xlu0 0
    %147 = vperm.xlu0 %146, %v136
    %v148 = vpop.permute.xlu0 %147
    %151 = vset.pattern.permute.xlu0 0
    %152 = vperm.xlu0 %151, %v137
    %v153 = vpop.permute.xlu0 %152
    %156 = vset.pattern.permute.xlu0 0
    %157 = vperm.xlu0 %156, %v138
    %v158 = vpop.permute.xlu0 %157
    %161 = vset.pattern.permute.xlu0 0
    %162 = vperm.xlu0 %161, %v139
    %v163 = vpop.permute.xlu0 %162
    %v165 = vadd.f32 %v130, %v143
    %v166 = vadd.f32 %v131, %v148
    %v167 = vadd.f32 %v132, %v153
    %v168 = vadd.f32 %v133, %v158
    %v169 = vadd.f32 %v134, %v163
    %v170 = vmax.f32 %v165, 0.0
    %v171 = vmax.f32 %v166, 0.0
    %v172 = vmax.f32 %v167, 0.0
    %v173 = vmax.f32 %v168, 0.0
    %v174 = vmax.f32 %v169, 0.0
    %v175 = vld [vmem:[%s3] sm:$0xff]
    %v176 = vld [vmem:[%s3 + $0x8] sm:$0xff]
    %v177 = vld [vmem:[%s3 + $0x10] sm:$0xff]
    %v178 = vld [vmem:[%s3 + $0x18] sm:$0xff]
    %v179 = vld [vmem:[%s3 + $0x20] sm:$0xff]
    %v180 = vld [vmem:[%s4] sm:$0xff]
    %v181 = vld [vmem:[%s4 + $0x8] sm:$0xff]
    %v182 = vld [vmem:[%s4 + $0x10] sm:$0xff]
    %v183 = vld [vmem:[%s4 + $0x18] sm:$0xff]
    %v184 = vld [vmem:[%s4 + $0x20] sm:$0xff]
    %186 = vset.pattern.permute.xlu0 0
    %187 = vperm.xlu0 %186, %v180
    %v188 = vpop.permute.xlu0 %187
    %191 = vset.pattern.permute.xlu0 0
    %192 = vperm.xlu0 %191, %v181
    %v193 = vpop.permute.xlu0 %192
    %196 = vset.pattern.permute.xlu0 0
    %197 = vperm.xlu0 %196, %v182
    %v198 = vpop.permute.xlu0 %197
    %201 = vset.pattern.permute.xlu0 0
    %202 = vperm.xlu0 %201, %v183
    %v203 = vpop.permute.xlu0 %202
    %206 = vset.pattern.permute.xlu0 0
    %207 = vperm.xlu0 %206, %v184
    %v208 = vpop.permute.xlu0 %207
    %vm210 = vcmask 326656
    %v212 = vsel %vm210, %v175, 0
    %v215 = vsel %vm210, %v176, 0
    %v218 = vsel %vm210, %v177, 0
    %v221 = vsel %vm210, %v178, 0
    %v224 = vsel %vm210, %v179, 0
    %226 = vmatprep.subr.mxu0 0.0
    %227 = vmatpush1.msra.mxu0 %v170
    %228 = vmatprep.subr.mxu0 0.0
    %229 = vmatpush1.msra.mxu0 %v171
    %230 = vmatprep.subr.mxu0 0.0
    %231 = vmatpush1.msra.mxu0 %v172
    %232 = vmatprep.subr.mxu0 0.0
    %233 = vmatpush1.msra.mxu0 %v173
    %234 = vmatprep.subr.mxu0 0.0
    %235 = vmatpush1.msra.mxu0 %v174
    %236 = vmatprep.subr.mxu0 0.0
    %237 = vmatpush1.msra.mxu0 0.0
    %238 = vmatprep.subr.mxu0 0.0
    %239 = vmatpush1.msra.mxu0 0.0
    %240 = vmatprep.subr.mxu0 0.0
    %241 = vmatpush1.msra.mxu0 0.0
    %242 = vmatprep.subr.mxu0 0.0
    %243 = vmatpush1.msra.mxu0 0.0
    %244 = vmatprep.subr.mxu0 0.0
    %245 = vmatpush1.msra.mxu0 0.0
    %246 = vmatprep.subr.mxu0 0.0
    %247 = vmatpush1.msra.mxu0 0.0
    %248 = vmatprep.subr.mxu0 0.0
    %249 = vmatpush1.msra.mxu0 0.0
    %250 = vmatprep.subr.mxu0 0.0
    %251 = vmatpush1.msra.mxu0 0.0
    %252 = vmatprep.subr.mxu0 0.0
    %253 = vmatpush1.msra.mxu0 0.0
    %254 = vmatprep.subr.mxu0 0.0
    %255 = vmatpush1.msra.mxu0 0.0
    %256 = vmatprep.subr.mxu0 0.0
    %257 = vmatpush1.msra.mxu0 0.0
    %258 = vmatprep.subr.mxu0 0.0
    %259 = vmatpush1.msra.mxu0 0.0
    %260 = vmatprep.subr.mxu0 0.0
    %261 = vmatpush1.msra.mxu0 0.0
    %262 = vmatprep.subr.mxu0 0.0
    %263 = vmatpush1.msra.mxu0 0.0
    %264 = vmatprep.subr.mxu0 0.0
    %265 = vmatpush1.msra.mxu0 0.0
    %266 = vmatprep.subr.mxu0 0.0
    %267 = vmatpush1.msra.mxu0 0.0
    %268 = vmatprep.subr.mxu0 0.0
    %269 = vmatpush1.msra.mxu0 0.0
    %270 = vmatprep.subr.mxu0 0.0
    %271 = vmatpush1.msra.mxu0 0.0
    %272 = vmatprep.subr.mxu0 0.0
    %273 = vmatpush1.msra.mxu0 0.0
    %274 = vmatprep.subr.mxu0 0.0
    %275 = vmatpush1.msra.mxu0 0.0
    %276 = vmatprep.subr.mxu0 0.0
    %277 = vmatpush1.msra.mxu0 0.0
    %278 = vmatprep.subr.mxu0 0.0
    %279 = vmatpush1.msra.mxu0 0.0
    %280 = vmatprep.subr.mxu0 0.0
    %281 = vmatpush1.msra.mxu0 0.0
    %282 = vmatprep.subr.mxu0 0.0
    %283 = vmatpush1.msra.mxu0 0.0
    %284 = vmatprep.subr.mxu0 0.0
    %285 = vmatpush1.msra.mxu0 0.0
    %286 = vmatprep.subr.mxu0 0.0
    %287 = vmatpush1.msra.mxu0 0.0
    %288 = vmatprep.subr.mxu0 0.0
    %289 = vmatpush1.msra.mxu0 0.0
    %290 = vmatprep.mubr.f32.mxu0 0.0
    %291 = vmatmul.mubr.f32.gmra.mrb[0].mxu0 %v212
    %v292 = vpop.f32.mrb[0].mxu0
    %v293 = vadd.f32 %v188, %v292
    %v294 = vpop.f32.mrb[0].mxu0
    %295 = vmatprep.mubr.f32.mxu0 0.0
    %296 = vmatmul.mubr.f32.gmra.mrb[0].mxu0 %v215
    %v297 = vpop.f32.mrb[0].mxu0
    %v298 = vadd.f32 %v193, %v297
    %v299 = vpop.f32.mrb[0].mxu0
    %300 = vmatprep.mubr.f32.mxu0 0.0
    %301 = vmatmul.mubr.f32.gmra.mrb[0].mxu0 %v218
    %v302 = vpop.f32.mrb[0].mxu0
    %v303 = vadd.f32 %v198, %v302
    %v304 = vpop.f32.mrb[0].mxu0
    %305 = vmatprep.mubr.f32.mxu0 0.0
    %306 = vmatmul.mubr.f32.gmra.mrb[0].mxu0 %v221
    %v307 = vpop.f32.mrb[0].mxu0
    %v308 = vadd.f32 %v203, %v307
    %v309 = vpop.f32.mrb[0].mxu0
    %310 = vmatprep.mubr.f32.mxu0 0.0
    %311 = vmatmul.mubr.f32.gmra.mrb[0].mxu0 %v224
    %v312 = vpop.f32.mrb[0].mxu0
    %v313 = vadd.f32 %v208, %v312
    %v314 = vpop.f32.mrb[0].mxu0
    %315 = vdwg.mxu0
    %v316 = vmax.f32 %v293, 0.0
    %v317 = vmax.f32 %v298, 0.0
    %v318 = vmax.f32 %v303, 0.0
    %v319 = vmax.f32 %v308, 0.0
    %v320 = vmax.f32 %v313, 0.0
    %v321 = vld [vmem:[%s5] sm:$0xff]
    %v322 = vld [vmem:[%s6] sm:$0xff]
    %324 = vset.pattern.permute.xlu0 0
    %325 = vperm.xlu0 %324, %v322
    %v326 = vpop.permute.xlu0 %325
    %v329 = vsel %vm210, %v321, 0
    %331 = vmatprep.subr.mxu0 0.0
    %332 = vmatpush1.msra.mxu0 %v316
    %333 = vmatprep.subr.mxu0 0.0
    %334 = vmatpush1.msra.mxu0 %v317
    %335 = vmatprep.subr.mxu0 0.0
    %336 = vmatpush1.msra.mxu0 %v318
    %337 = vmatprep.subr.mxu0 0.0
    %338 = vmatpush1.msra.mxu0 %v319
    %339 = vmatprep.subr.mxu0 0.0
    %340 = vmatpush1.msra.mxu0 %v320
    %341 = vmatprep.subr.mxu0 0.0
    %342 = vmatpush1.msra.mxu0 0.0
    %343 = vmatprep.subr.mxu0 0.0
    %344 = vmatpush1.msra.mxu0 0.0
    %345 = vmatprep.subr.mxu0 0.0
    %346 = vmatpush1.msra.mxu0 0.0
    %347 = vmatprep.subr.mxu0 0.0
    %348 = vmatpush1.msra.mxu0 0.0
    %349 = vmatprep.subr.mxu0 0.0
    %350 = vmatpush1.msra.mxu0 0.0
    %351 = vmatprep.subr.mxu0 0.0
    %352 = vmatpush1.msra.mxu0 0.0
    %353 = vmatprep.subr.mxu0 0.0
    %354 = vmatpush1.msra.mxu0 0.0
    %355 = vmatprep.subr.mxu0 0.0
    %356 = vmatpush1.msra.mxu0 0.0
    %357 = vmatprep.subr.mxu0 0.0
    %358 = vmatpush1.msra.mxu0 0.0
    %359 = vmatprep.subr.mxu0 0.0
    %360 = vmatpush1.msra.mxu0 0.0
    %361 = vmatprep.subr.mxu0 0.0
    %362 = vmatpush1.msra.mxu0 0.0
    %363 = vmatprep.subr.mxu0 0.0
    %364 = vmatpush1.msra.mxu0 0.0
    %365 = vmatprep.subr.mxu0 0.0
    %366 = vmatpush1.msra.mxu0 0.0
    %367 = vmatprep.subr.mxu0 0.0
    %368 = vmatpush1.msra.mxu0 0.0
    %369 = vmatprep.subr.mxu0 0.0
    %370 = vmatpush1.msra.mxu0 0.0
    %371 = vmatprep.subr.mxu0 0.0
    %372 = vmatpush1.msra.mxu0 0.0
    %373 = vmatprep.subr.mxu0 0.0
    %374 = vmatpush1.msra.mxu0 0.0
    %375 = vmatprep.subr.mxu0 0.0
    %376 = vmatpush1.msra.mxu0 0.0
    %377 = vmatprep.subr.mxu0 0.0
    %378 = vmatpush1.msra.mxu0 0.0
    %379 = vmatprep.subr.mxu0 0.0
    %380 = vmatpush1.msra.mxu0 0.0
    %381 = vmatprep.subr.mxu0 0.0
    %382 = vmatpush1.msra.mxu0 0.0
    %383 = vmatprep.subr.mxu0 0.0
    %384 = vmatpush1.msra.mxu0 0.0
    %385 = vmatprep.subr.mxu0 0.0
    %386 = vmatpush1.msra.mxu0 0.0
    %387 = vmatprep.subr.mxu0 0.0
    %388 = vmatpush1.msra.mxu0 0.0
    %389 = vmatprep.subr.mxu0 0.0
    %390 = vmatpush1.msra.mxu0 0.0
    %391 = vmatprep.subr.mxu0 0.0
    %392 = vmatpush1.msra.mxu0 0.0
    %393 = vmatprep.subr.mxu0 0.0
    %394 = vmatpush1.msra.mxu0 0.0
    %395 = vmatprep.mubr.f32.mxu0 0.0
    %396 = vmatmul.mubr.f32.gmra.mrb[0].mxu0 %v329
    %v397 = vpop.f32.mrb[0].mxu0
    %v398 = vadd.f32 %v326, %v397
    %v399 = vpop.f32.mrb[0].mxu0
    %400 = vdwg.mxu0
    %v401 = vsub.f32 1.0, %v27
    %v402 = vmul.f32 %v27, %v401
    %v404 = vrot.slane %v27, 1
    %v406 = vmul.f32 %v402, %v404
    %v408 = vrot.slane %v401, 1
    %v410 = vmul.f32 %v406, %v408
    %v411 = vmul.f32 %v27, 3.1415927
    %v412 = vand.u32 2147483647, %v411
    %vm413 = vcmp.le.f32.partialorder %v412, 0.7853982
    %vm414 = vcmp.lt.s32.totalorder %v411, 0
    %v415 = vand.u32 %v411, 2139095040
    %v416 = vshrl.u32 %v415, 23
    %v417 = vsub.s32 %v416, 127
    %v418 = vand.u32 2147483647, %v411
    %v419 = vand.u32 %v418, 8388607
    %v420 = vor.u32 %v419, 8388608
    %v421 = vsub.s32 0, %v420
    %v422 = vadd.s32 %v417, 1
    %vm423 = vcmp.gt.s32.totalorder %v422, 0
    %v424 = vsel %vm423, %v422, 0
    %v425 = vshrl.u32 %v424, 5
    %v426 = vand.u32 %v424, 31
    %v427 = vsub.s32 32, %v426
    %v428 = vshrl.u32 683565275, %v427
    %v429 = vshll.u32 683565275, %v426
    %v430 = vshrl.u32 2475754826, %v427
    %v431 = vor.u32 %v429, %v430
    %v432 = vshll.u32 2475754826, %v426
    %v433 = vshrl.u32 2131351028, %v427
    %v434 = vor.u32 %v432, %v433
    %v435 = vshll.u32 2131351028, %v426
    %v436 = vshrl.u32 2102212464, %v427
    %v437 = vor.u32 %v435, %v436
    %v438 = vshll.u32 2102212464, %v426
    %v439 = vshrl.u32 920167782, %v427
    %v440 = vor.u32 %v438, %v439
    %v441 = vshll.u32 920167782, %v426
    %v442 = vshrl.u32 1326507024, %v427
    %v443 = vor.u32 %v441, %v442
    %vm444 = vcmp.lt.s32.totalorder %v425, 1
    %vm445 = vcmp.lt.s32.totalorder %v425, 2
    %vm446 = vcmp.lt.s32.totalorder %v425, 3
    %vm447 = vcmp.lt.s32.totalorder %v425, 4
    %v448 = vsel %vm444, %v428, %v431
    %v449 = vsel %vm447, %v437, 2102212464
    %v450 = vsel %vm446, %v434, %v449
    %v451 = vsel %vm445, %v448, %v450
    %v452 = vsel %vm444, %v431, %v434
    %v453 = vsel %vm447, %v440, 920167782
    %v454 = vsel %vm446, %v437, %v453
    %v455 = vsel %vm445, %v452, %v454
    %v456 = vsel %vm444, %v434, %v437
    %v457 = vsel %vm447, %v443, 1326507024
    %v458 = vsel %vm446, %v440, %v457
    %v459 = vsel %vm445, %v456, %v458
    %v460 = vshll.u32 %v420, 8
    %v461 = vmul.u32.u64.compose %v460, %v459
    %v462 = vextract.low.u32 %v461
    %v463 = vextract.high.u32 %v461
    %v464 = vmul.u32.u64.compose %v460, %v455
    %v465 = vextract.low.u32 %v464
    %v466 = vextract.high.u32 %v464
    %v467 = vmul.u32 %v460, %v451
    %v468 = vadd.s32 %v463, %v465
    %vm469 = vc.u32 %v463, %v465
    %v470 = vadd.s32 %v466, 1
    %v471 = vsel %vm469, %v470, %v466
    %v472 = vadd.s32 %v467, %v471
    %v473 = vadd.s32 %v472, 536870912
    %v474 = vshrl.u32 %v473, 30
    %v475 = vshll.u32 %v474, 30
    %v476 = vsub.s32 %v472, %v475
    %vm477 = vcmp.lt.s32.totalorder %v476, 0
    %v478 = vsub.s32 0, %v476
    %v479 = vsel %vm477, %v478, %v476
    %v480 = vclz %v479
    %v481 = vsub.s32 %v480, 2
    %vm482 = vcmp.gt.s32.totalorder 0, %v481
    %v483 = vsel %vm482, 0, %v481
    %v484 = vsub.s32 32, %v483
    %v485 = vshll.u32 %v476, %v483
    %v486 = vshrl.u32 %v468, %v484
    %v487 = vor.u32 %v485, %v486
    %v488 = vsub.s32 4294967266, %v483
    %v489 = vadd.s32 %v488, 127
    %v490 = vshll.u32 %v489, 23
    %v491 = vor.u32 4788187, %v490
    %v492 = vand.u32 2147483647, %v491
    %v494 = vcvt.s32.f32 %v487
    %v495 = vmul.f32 %v494, %v492
    %v496 = vxor.u32 %v495, 2147483648
    %v497 = vsel %vm414, %v496, %v495
    %v498 = vsub.s32 4, %v474
    %v499 = vsel %vm414, %v498, %v474
    %v500 = vsel %vm413, %v411, %v497
    %v501 = vsel %vm413, 0, %v499
    %v502 = vcosq.f32.pop %v500
    %v503 = vsinq.f32.pop %v500
    %vm504 = vweird.f32 %v411
    %v505 = vadd.s32 %v501, 3
    %v506 = vand.u32 %v505, 3
    %vm507 = vcmp.lt.s32.totalorder %v506, 2
    %vm508 = vcmp.eq.s32.totalorder %v506, 0
    %v509 = vxor.u32 %v503, 2147483648
    %v510 = vsel %vm508, %v502, %v509
    %vm511 = vcmp.eq.s32.totalorder %v506, 2
    %v512 = vxor.u32 %v502, 2147483648
    %v513 = vsel %vm511, %v512, %v503
    %v514 = vsel %vm507, %v510, %v513
    %v515 = vsel %vm504, nan, %v514
    %v517 = vrot.slane %v515, 1
    %v519 = vmul.f32 %v515, %v517
    %v520 = vmul.f32 %v27, 4.442883
    %v521 = vand.u32 2147483647, %v520
    %vm522 = vcmp.le.f32.partialorder %v521, 0.7853982
    %vm523 = vcmp.lt.s32.totalorder %v520, 0
    %v524 = vand.u32 %v520, 2139095040
    %v525 = vshrl.u32 %v524, 23
    %v526 = vsub.s32 %v525, 127
    %v527 = vand.u32 2147483647, %v520
    %v528 = vand.u32 %v527, 8388607
    %v529 = vor.u32 %v528, 8388608
    %v530 = vsub.s32 0, %v529
    %v531 = vadd.s32 %v526, 1
    %vm532 = vcmp.gt.s32.totalorder %v531, 0
    %v533 = vsel %vm532, %v531, 0
    %v534 = vshrl.u32 %v533, 5
    %v535 = vand.u32 %v533, 31
    %v536 = vsub.s32 32, %v535
    %v537 = vshrl.u32 683565275, %v536
    %v538 = vshll.u32 683565275, %v535
    %v539 = vshrl.u32 2475754826, %v536
    %v540 = vor.u32 %v538, %v539
    %v541 = vshll.u32 2475754826, %v535
    %v542 = vshrl.u32 2131351028, %v536
    %v543 = vor.u32 %v541, %v542
    %v544 = vshll.u32 2131351028, %v535
    %v545 = vshrl.u32 2102212464, %v536
    %v546 = vor.u32 %v544, %v545
    %v547 = vshll.u32 2102212464, %v535
    %v548 = vshrl.u32 920167782, %v536
    %v549 = vor.u32 %v547, %v548
    %v550 = vshll.u32 920167782, %v535
    %v551 = vshrl.u32 1326507024, %v536
    %v552 = vor.u32 %v550, %v551
    %vm553 = vcmp.lt.s32.totalorder %v534, 1
    %vm554 = vcmp.lt.s32.totalorder %v534, 2
    %vm555 = vcmp.lt.s32.totalorder %v534, 3
    %vm556 = vcmp.lt.s32.totalorder %v534, 4
    %v557 = vsel %vm553, %v537, %v540
    %v558 = vsel %vm556, %v546, 2102212464
    %v559 = vsel %vm555, %v543, %v558
    %v560 = vsel %vm554, %v557, %v559
    %v561 = vsel %vm553, %v540, %v543
    %v562 = vsel %vm556, %v549, 920167782
    %v563 = vsel %vm555, %v546, %v562
    %v564 = vsel %vm554, %v561, %v563
    %v565 = vsel %vm553, %v543, %v546
    %v566 = vsel %vm556, %v552, 1326507024
    %v567 = vsel %vm555, %v549, %v566
    %v568 = vsel %vm554, %v565, %v567
    %v569 = vshll.u32 %v529, 8
    %v570 = vmul.u32.u64.compose %v569, %v568
    %v571 = vextract.low.u32 %v570
    %v572 = vextract.high.u32 %v570
    %v573 = vmul.u32.u64.compose %v569, %v564
    %v574 = vextract.low.u32 %v573
    %v575 = vextract.high.u32 %v573
    %v576 = vmul.u32 %v569, %v560
    %v577 = vadd.s32 %v572, %v574
    %vm578 = vc.u32 %v572, %v574
    %v579 = vadd.s32 %v575, 1
    %v580 = vsel %vm578, %v579, %v575
    %v581 = vadd.s32 %v576, %v580
    %v582 = vadd.s32 %v581, 536870912
    %v583 = vshrl.u32 %v582, 30
    %v584 = vshll.u32 %v583, 30
    %v585 = vsub.s32 %v581, %v584
    %vm586 = vcmp.lt.s32.totalorder %v585, 0
    %v587 = vsub.s32 0, %v585
    %v588 = vsel %vm586, %v587, %v585
    %v589 = vclz %v588
    %v590 = vsub.s32 %v589, 2
    %vm591 = vcmp.gt.s32.totalorder 0, %v590
    %v592 = vsel %vm591, 0, %v590
    %v593 = vsub.s32 32, %v592
    %v594 = vshll.u32 %v585, %v592
    %v595 = vshrl.u32 %v577, %v593
    %v596 = vor.u32 %v594, %v595
    %v597 = vsub.s32 4294967266, %v592
    %v598 = vadd.s32 %v597, 127
    %v599 = vshll.u32 %v598, 23
    %v600 = vor.u32 4788187, %v599
    %v601 = vand.u32 2147483647, %v600
    %v603 = vcvt.s32.f32 %v596
    %v604 = vmul.f32 %v603, %v601
    %v605 = vxor.u32 %v604, 2147483648
    %v606 = vsel %vm523, %v605, %v604
    %v607 = vsub.s32 4, %v583
    %v608 = vsel %vm523, %v607, %v583
    %v609 = vsel %vm522, %v520, %v606
    %v610 = vsel %vm522, 0, %v608
    %v611 = vcosq.f32.pop %v609
    %v612 = vsinq.f32.pop %v609
    %vm613 = vweird.f32 %v520
    %v614 = vand.u32 %v610, 3
    %vm615 = vcmp.lt.s32.totalorder %v614, 2
    %vm616 = vcmp.eq.s32.totalorder %v614, 0
    %v617 = vxor.u32 %v612, 2147483648
    %v618 = vsel %vm616, %v611, %v617
    %vm619 = vcmp.eq.s32.totalorder %v614, 2
    %v620 = vxor.u32 %v611, 2147483648
    %v621 = vsel %vm619, %v620, %v612
    %v622 = vsel %vm615, %v618, %v621
    %v623 = vsel %vm613, nan, %v622
    %v625 = vrot.slane %v623, 2
    %v627 = vmul.f32 %v519, %v625
    %v628 = vmul.f32 %v410, %v398
    %v629 = vrot.slane %v27, 2
    %v631 = vmul.f32 %v628, %v629
    %v632 = vadd.f32 %v631, %v627
    %633 = vst [vmem:[#allocation2] sm:$0x1] %v632
    // Predicated region
    $region30: #{tpu_custom_call.1} parent=1 // pred_check
      _
    $region31: #{tpu_custom_call.1} parent=1 // pred_check_branch
      %635 = sbr.rel (0) target = $region33
    $region32: #{tpu_custom_call.1} parent=1 // pred_region
      %s637 = ssub.s32 16, 16
      %638 = vsyncadd [#allocation3], %s637
      %s640 = sshll.u32 [#allocation2], 4
      %s641 = int_to_ptr.vmem [resolvable:$true] %s640
      %643 = dma.vmem_to_hbm [thread:$0]  %s641, 16, %s7, [#allocation3]
    $region33: #{tpu_custom_call.1} parent=1 // pred_fallthru
      _
    // Predicated region
    $region34: #{tpu_custom_call.1} parent=1 // pred_check
      _
    $region35: #{tpu_custom_call.1} parent=1 // pred_check_branch
      %645 = sbr.rel (0) target = $region37
    $region36: #{tpu_custom_call.1} parent=1 // pred_region
      %646 = dma.done [#allocation3], 16
    $region37: #{tpu_custom_call.1} parent=1 // pred_fallthru
      _
    %647 = vsyncpa [#allocation3], 1

</llo_original>
